<compile_context>
chip_gen: v7x
topology: tpu7x:2x2x1
jax: 0.10.0
libtpu: 0.0.40
codegen_flags: <defaults>
</compile_context>

<pallas_src>
import functools
import math

import jax
import jax.numpy as jnp
from jax.experimental import pallas as pl
from jax.experimental.pallas import tpu as pltpu


def _token_embedding_gather_kernel(ids_ref, emb_hbm, out_ref, buf, sems, *,
                                   block_n, scale):
    # ids_ref : (N_pad,) int32 in SMEM (scalar prefetch)
    # emb_hbm : (V, D) embedding table, left in HBM (pl.ANY)
    # out_ref : (block_n, D) output tile in VMEM
    # buf     : (2, block_n, D) VMEM landing buffer (double buffered)
    # sems    : (2,) DMA semaphores, one per buffer slot
    i = pl.program_id(0)
    n_steps = pl.num_programs(0)
    cur = i % 2

    def issue_block(step, slot):
        base = step * block_n
        for j in range(block_n):                      # static unroll
            row = ids_ref[base + j]                   # dynamic SMEM read
            pltpu.make_async_copy(
                emb_hbm.at[pl.ds(row, 1), :],         # (1, D) HBM row
                buf.at[slot, pl.ds(j, 1), :],         # (1, D) VMEM dst
                sems.at[slot],
            ).start()

    # Prime the pipeline on the first grid step.
    @pl.when(i == 0)
    def _():
        issue_block(0, 0)

    # Prefetch rows for the next grid step into the other slot (overlaps with
    # the wait + scale + store below).
    @pl.when(i + 1 < n_steps)
    def _():
        issue_block(i + 1, 1 - cur)

    # Wait for the current slot's rows (one wait per row-copy on the slot sem).
    for j in range(block_n):
        pltpu.make_async_copy(
            emb_hbm.at[pl.ds(0, 1), :],               # shape-matched descriptor
            buf.at[cur, pl.ds(j, 1), :],
            sems.at[cur],
        ).wait()

    out_ref[...] = (buf[cur].astype(jnp.float32) * scale).astype(out_ref.dtype)


def token_embedding(tokens, emb_table, *, block_n=128):
    """tokens: int array [...]; emb_table: [V, D] -> float array [..., D]."""
    V, D = emb_table.shape
    lead_shape = tokens.shape
    N = math.prod(lead_shape) if lead_shape else 1

    assert block_n % 8 == 0, "block_n must be a multiple of 8 (sublane tiling)"

    # Flatten, clamp (PyTorch would raise on OOB ids; we clamp to stay in-bounds
    # for the DMA gather), and pad to a multiple of block_n (pad id 0 is valid).
    ids = jnp.clip(tokens.astype(jnp.int32).reshape(-1), 0, V - 1)
    num_blocks = -(-N // block_n)
    n_pad = num_blocks * block_n
    if n_pad != N:
        ids = jnp.pad(ids, (0, n_pad - N))

    scale = math.sqrt(D)
    kernel = functools.partial(
        _token_embedding_gather_kernel, block_n=block_n, scale=scale
    )

    out_flat = pl.pallas_call(
        kernel,
        out_shape=jax.ShapeDtypeStruct((n_pad, D), emb_table.dtype),
        grid_spec=pltpu.PrefetchScalarGridSpec(
            num_scalar_prefetch=1,                     # ids -> SMEM
            grid=(num_blocks,),
            in_specs=[
                # Full embedding table stays in HBM; gathered manually via DMA.
                pl.BlockSpec(memory_space=pl.ANY),
            ],
            out_specs=pl.BlockSpec((block_n, D), lambda i, ids: (i, 0)),
            scratch_shapes=[
                pltpu.VMEM((2, block_n, D), emb_table.dtype),  # landing buffer
                pltpu.SemaphoreType.DMA((2,)),                  # one sem / slot
            ],
        ),
        compiler_params=pltpu.CompilerParams(
            # The grid axis carries the manual double-buffer state
            # (prefetch issued at step i, consumed at i+1) -> must be sequential.
            dimension_semantics=("arbitrary",),
            vmem_limit_bytes=32 * 1024 * 1024,
        ),
    )(ids, emb_table)

    return out_flat[:N].reshape(*lead_shape, D)


if __name__ == "__main__":
    # Small deterministic setup consistent with TokenEmbedding(vocab_size, emb_sz).
    # emb_sz chosen as a multiple of 128 so output stores are lane-dense.
    vocab_size = 64
    emb_sz = 128
    B, S = 2, 8

    key = jax.random.PRNGKey(0)
    k_emb, k_tok = jax.random.split(key)

    # Deterministic "parameters" (nn.Embedding weight ~ N(0, 1)).
    emb_table = jax.random.normal(k_emb, (vocab_size, emb_sz), dtype=jnp.float32)
    tokens = jax.random.randint(k_tok, (B, S), 0, vocab_size, dtype=jnp.int32)

    # block_n=8 keeps the demo tiny while still exercising the prime /
    # prefetch-next / last-step paths of the double-buffered gather.
    out = token_embedding(tokens, emb_table, block_n=8)
    out = jax.block_until_ready(out)

    # Reference check (plain JAX gather * sqrt(emb_sz)).
    ref = emb_table[tokens] * math.sqrt(emb_sz)
    assert out.shape == (B, S, emb_sz)
    assert jnp.allclose(out, ref, atol=1e-5, rtol=1e-5)

    print("KERNEL_OK")
</pallas_src>

<mosaic_0001>
module attributes {stable_mosaic.version = 11 : i64} {
  func.func @_token_embedding_gather_kernel(%arg0: i32, %arg1: memref<16xi32, #tpu.memory_space<smem>>, %arg2: memref<64x128xf32, #tpu.memory_space<any>>, %arg3: memref<8x128xf32, #tpu.memory_space<vmem>>, %arg4: memref<2x8x128xf32, #tpu.memory_space<vmem>>, %arg5: memref<2x!tpu.dma_semaphore, #tpu.memory_space<semaphore_mem>>) attributes {dimension_semantics = [#tpu.dimension_semantics<arbitrary>], iteration_bounds = array<i64: 2>, scalar_prefetch = 1 : i64, scratch_operands = 2 : i64, tpu.core_type = #tpu.core_type<tc>, window_params = [{}, {transform_indices = @transform_1, window_bounds = array<i64: 8, 128>}]} {
    %c2_i32 = arith.constant 2 : i32
    %c0_i32 = arith.constant 0 : i32
    %0 = arith.cmpi eq, %c2_i32, %c0_i32 : i32
    %c1_i32 = arith.constant 1 : i32
    %1 = arith.select %0, %c1_i32, %c2_i32 : i32
    %2 = arith.remsi %arg0, %1 : i32
    %c0_i32_0 = arith.constant 0 : i32
    %3 = arith.cmpi ne, %2, %c0_i32_0 : i32
    %c0_i32_1 = arith.constant 0 : i32
    %4 = arith.cmpi slt, %2, %c0_i32_1 : i32
    %c0_i32_2 = arith.constant 0 : i32
    %5 = arith.cmpi slt, %1, %c0_i32_2 : i32
    %6 = arith.xori %4, %5 : i1
    %7 = arith.andi %6, %3 : i1
    %8 = arith.addi %2, %1 : i32
    %9 = arith.select %7, %8, %2 : i32
    %c0_i32_3 = arith.constant 0 : i32
    %10 = arith.cmpi eq, %arg0, %c0_i32_3 : i32
    %11 = arith.extui %10 : i1 to i32
    %c0_i32_4 = arith.constant 0 : i32
    %12 = arith.cmpi ne, %11, %c0_i32_4 : i32
    scf.if %12 {
      %c0_38 = arith.constant 0 : index
      %63 = memref.load %arg1[%c0_38] : memref<16xi32, #tpu.memory_space<smem>>
      %c0_i32_39 = arith.constant 0 : i32
      %c0_i32_40 = arith.constant 0 : i32
      %c0_i32_41 = arith.constant 0 : i32
      %64 = tpu.memref_slice %arg2[%63, %c0_i32_41] : memref<64x128xf32, #tpu.memory_space<any>> -> memref<1x128xf32, #tpu.memory_space<any>>
      %c0_i32_42 = arith.constant 0 : i32
      %c0_i32_43 = arith.constant 0 : i32
      %65 = tpu.memref_slice %arg4[%c0_i32_39, %c0_i32_42, %c0_i32_43] : memref<2x8x128xf32, #tpu.memory_space<vmem>> -> memref<1x1x128xf32, #tpu.memory_space<vmem>>
      %66 = tpu.memref_squeeze %65 : memref<1x1x128xf32, #tpu.memory_space<vmem>> -> memref<1x128xf32, #tpu.memory_space<vmem>>
      %67 = tpu.memref_slice %arg5[%c0_i32_40] : memref<2x!tpu.dma_semaphore, #tpu.memory_space<semaphore_mem>> -> memref<1x!tpu.dma_semaphore, #tpu.memory_space<semaphore_mem>>
      %68 = tpu.memref_squeeze %67 : memref<1x!tpu.dma_semaphore, #tpu.memory_space<semaphore_mem>> -> memref<!tpu.dma_semaphore, #tpu.memory_space<semaphore_mem>>
      tpu.enqueue_dma source(%64 : memref<1x128xf32, #tpu.memory_space<any>>) target(%66 : memref<1x128xf32, #tpu.memory_space<vmem>>) target_semaphore(%68 : memref<!tpu.dma_semaphore, #tpu.memory_space<semaphore_mem>>)
      %c1 = arith.constant 1 : index
      %69 = memref.load %arg1[%c1] : memref<16xi32, #tpu.memory_space<smem>>
      %c0_i32_44 = arith.constant 0 : i32
      %c0_i32_45 = arith.constant 0 : i32
      %c0_i32_46 = arith.constant 0 : i32
      %70 = tpu.memref_slice %arg2[%69, %c0_i32_46] : memref<64x128xf32, #tpu.memory_space<any>> -> memref<1x128xf32, #tpu.memory_space<any>>
      %c1_i32_47 = arith.constant 1 : i32
      %c0_i32_48 = arith.constant 0 : i32
      %71 = tpu.memref_slice %arg4[%c0_i32_44, %c1_i32_47, %c0_i32_48] : memref<2x8x128xf32, #tpu.memory_space<vmem>> -> memref<1x1x128xf32, #tpu.memory_space<vmem>>
      %72 = tpu.memref_squeeze %71 : memref<1x1x128xf32, #tpu.memory_space<vmem>> -> memref<1x128xf32, #tpu.memory_space<vmem>>
      %73 = tpu.memref_slice %arg5[%c0_i32_45] : memref<2x!tpu.dma_semaphore, #tpu.memory_space<semaphore_mem>> -> memref<1x!tpu.dma_semaphore, #tpu.memory_space<semaphore_mem>>
      %74 = tpu.memref_squeeze %73 : memref<1x!tpu.dma_semaphore, #tpu.memory_space<semaphore_mem>> -> memref<!tpu.dma_semaphore, #tpu.memory_space<semaphore_mem>>
      tpu.enqueue_dma source(%70 : memref<1x128xf32, #tpu.memory_space<any>>) target(%72 : memref<1x128xf32, #tpu.memory_space<vmem>>) target_semaphore(%74 : memref<!tpu.dma_semaphore, #tpu.memory_space<semaphore_mem>>)
      %c2 = arith.constant 2 : index
      %75 = memref.load %arg1[%c2] : memref<16xi32, #tpu.memory_space<smem>>
      %c0_i32_49 = arith.constant 0 : i32
      %c0_i32_50 = arith.constant 0 : i32
      %c0_i32_51 = arith.constant 0 : i32
      %76 = tpu.memref_slice %arg2[%75, %c0_i32_51] : memref<64x128xf32, #tpu.memory_space<any>> -> memref<1x128xf32, #tpu.memory_space<any>>
      %c2_i32_52 = arith.constant 2 : i32
      %c0_i32_53 = arith.constant 0 : i32
      %77 = tpu.memref_slice %arg4[%c0_i32_49, %c2_i32_52, %c0_i32_53] : memref<2x8x128xf32, #tpu.memory_space<vmem>> -> memref<1x1x128xf32, #tpu.memory_space<vmem>>
      %78 = tpu.memref_squeeze %77 : memref<1x1x128xf32, #tpu.memory_space<vmem>> -> memref<1x128xf32, #tpu.memory_space<vmem>>
      %79 = tpu.memref_slice %arg5[%c0_i32_50] : memref<2x!tpu.dma_semaphore, #tpu.memory_space<semaphore_mem>> -> memref<1x!tpu.dma_semaphore, #tpu.memory_space<semaphore_mem>>
      %80 = tpu.memref_squeeze %79 : memref<1x!tpu.dma_semaphore, #tpu.memory_space<semaphore_mem>> -> memref<!tpu.dma_semaphore, #tpu.memory_space<semaphore_mem>>
      tpu.enqueue_dma source(%76 : memref<1x128xf32, #tpu.memory_space<any>>) target(%78 : memref<1x128xf32, #tpu.memory_space<vmem>>) target_semaphore(%80 : memref<!tpu.dma_semaphore, #tpu.memory_space<semaphore_mem>>)
      %c3 = arith.constant 3 : index
      %81 = memref.load %arg1[%c3] : memref<16xi32, #tpu.memory_space<smem>>
      %c0_i32_54 = arith.constant 0 : i32
      %c0_i32_55 = arith.constant 0 : i32
      %c0_i32_56 = arith.constant 0 : i32
      %82 = tpu.memref_slice %arg2[%81, %c0_i32_56] : memref<64x128xf32, #tpu.memory_space<any>> -> memref<1x128xf32, #tpu.memory_space<any>>
      %c3_i32_57 = arith.constant 3 : i32
      %c0_i32_58 = arith.constant 0 : i32
      %83 = tpu.memref_slice %arg4[%c0_i32_54, %c3_i32_57, %c0_i32_58] : memref<2x8x128xf32, #tpu.memory_space<vmem>> -> memref<1x1x128xf32, #tpu.memory_space<vmem>>
      %84 = tpu.memref_squeeze %83 : memref<1x1x128xf32, #tpu.memory_space<vmem>> -> memref<1x128xf32, #tpu.memory_space<vmem>>
      %85 = tpu.memref_slice %arg5[%c0_i32_55] : memref<2x!tpu.dma_semaphore, #tpu.memory_space<semaphore_mem>> -> memref<1x!tpu.dma_semaphore, #tpu.memory_space<semaphore_mem>>
      %86 = tpu.memref_squeeze %85 : memref<1x!tpu.dma_semaphore, #tpu.memory_space<semaphore_mem>> -> memref<!tpu.dma_semaphore, #tpu.memory_space<semaphore_mem>>
      tpu.enqueue_dma source(%82 : memref<1x128xf32, #tpu.memory_space<any>>) target(%84 : memref<1x128xf32, #tpu.memory_space<vmem>>) target_semaphore(%86 : memref<!tpu.dma_semaphore, #tpu.memory_space<semaphore_mem>>)
      %c4 = arith.constant 4 : index
      %87 = memref.load %arg1[%c4] : memref<16xi32, #tpu.memory_space<smem>>
      %c0_i32_59 = arith.constant 0 : i32
      %c0_i32_60 = arith.constant 0 : i32
      %c0_i32_61 = arith.constant 0 : i32
      %88 = tpu.memref_slice %arg2[%87, %c0_i32_61] : memref<64x128xf32, #tpu.memory_space<any>> -> memref<1x128xf32, #tpu.memory_space<any>>
      %c4_i32_62 = arith.constant 4 : i32
      %c0_i32_63 = arith.constant 0 : i32
      %89 = tpu.memref_slice %arg4[%c0_i32_59, %c4_i32_62, %c0_i32_63] : memref<2x8x128xf32, #tpu.memory_space<vmem>> -> memref<1x1x128xf32, #tpu.memory_space<vmem>>
      %90 = tpu.memref_squeeze %89 : memref<1x1x128xf32, #tpu.memory_space<vmem>> -> memref<1x128xf32, #tpu.memory_space<vmem>>
      %91 = tpu.memref_slice %arg5[%c0_i32_60] : memref<2x!tpu.dma_semaphore, #tpu.memory_space<semaphore_mem>> -> memref<1x!tpu.dma_semaphore, #tpu.memory_space<semaphore_mem>>
      %92 = tpu.memref_squeeze %91 : memref<1x!tpu.dma_semaphore, #tpu.memory_space<semaphore_mem>> -> memref<!tpu.dma_semaphore, #tpu.memory_space<semaphore_mem>>
      tpu.enqueue_dma source(%88 : memref<1x128xf32, #tpu.memory_space<any>>) target(%90 : memref<1x128xf32, #tpu.memory_space<vmem>>) target_semaphore(%92 : memref<!tpu.dma_semaphore, #tpu.memory_space<semaphore_mem>>)
      %c5 = arith.constant 5 : index
      %93 = memref.load %arg1[%c5] : memref<16xi32, #tpu.memory_space<smem>>
      %c0_i32_64 = arith.constant 0 : i32
      %c0_i32_65 = arith.constant 0 : i32
      %c0_i32_66 = arith.constant 0 : i32
      %94 = tpu.memref_slice %arg2[%93, %c0_i32_66] : memref<64x128xf32, #tpu.memory_space<any>> -> memref<1x128xf32, #tpu.memory_space<any>>
      %c5_i32_67 = arith.constant 5 : i32
      %c0_i32_68 = arith.constant 0 : i32
      %95 = tpu.memref_slice %arg4[%c0_i32_64, %c5_i32_67, %c0_i32_68] : memref<2x8x128xf32, #tpu.memory_space<vmem>> -> memref<1x1x128xf32, #tpu.memory_space<vmem>>
      %96 = tpu.memref_squeeze %95 : memref<1x1x128xf32, #tpu.memory_space<vmem>> -> memref<1x128xf32, #tpu.memory_space<vmem>>
      %97 = tpu.memref_slice %arg5[%c0_i32_65] : memref<2x!tpu.dma_semaphore, #tpu.memory_space<semaphore_mem>> -> memref<1x!tpu.dma_semaphore, #tpu.memory_space<semaphore_mem>>
      %98 = tpu.memref_squeeze %97 : memref<1x!tpu.dma_semaphore, #tpu.memory_space<semaphore_mem>> -> memref<!tpu.dma_semaphore, #tpu.memory_space<semaphore_mem>>
      tpu.enqueue_dma source(%94 : memref<1x128xf32, #tpu.memory_space<any>>) target(%96 : memref<1x128xf32, #tpu.memory_space<vmem>>) target_semaphore(%98 : memref<!tpu.dma_semaphore, #tpu.memory_space<semaphore_mem>>)
      %c6 = arith.constant 6 : index
      %99 = memref.load %arg1[%c6] : memref<16xi32, #tpu.memory_space<smem>>
      %c0_i32_69 = arith.constant 0 : i32
      %c0_i32_70 = arith.constant 0 : i32
      %c0_i32_71 = arith.constant 0 : i32
      %100 = tpu.memref_slice %arg2[%99, %c0_i32_71] : memref<64x128xf32, #tpu.memory_space<any>> -> memref<1x128xf32, #tpu.memory_space<any>>
      %c6_i32_72 = arith.constant 6 : i32
      %c0_i32_73 = arith.constant 0 : i32
      %101 = tpu.memref_slice %arg4[%c0_i32_69, %c6_i32_72, %c0_i32_73] : memref<2x8x128xf32, #tpu.memory_space<vmem>> -> memref<1x1x128xf32, #tpu.memory_space<vmem>>
      %102 = tpu.memref_squeeze %101 : memref<1x1x128xf32, #tpu.memory_space<vmem>> -> memref<1x128xf32, #tpu.memory_space<vmem>>
      %103 = tpu.memref_slice %arg5[%c0_i32_70] : memref<2x!tpu.dma_semaphore, #tpu.memory_space<semaphore_mem>> -> memref<1x!tpu.dma_semaphore, #tpu.memory_space<semaphore_mem>>
      %104 = tpu.memref_squeeze %103 : memref<1x!tpu.dma_semaphore, #tpu.memory_space<semaphore_mem>> -> memref<!tpu.dma_semaphore, #tpu.memory_space<semaphore_mem>>
      tpu.enqueue_dma source(%100 : memref<1x128xf32, #tpu.memory_space<any>>) target(%102 : memref<1x128xf32, #tpu.memory_space<vmem>>) target_semaphore(%104 : memref<!tpu.dma_semaphore, #tpu.memory_space<semaphore_mem>>)
      %c7 = arith.constant 7 : index
      %105 = memref.load %arg1[%c7] : memref<16xi32, #tpu.memory_space<smem>>
      %c0_i32_74 = arith.constant 0 : i32
      %c0_i32_75 = arith.constant 0 : i32
      %c0_i32_76 = arith.constant 0 : i32
      %106 = tpu.memref_slice %arg2[%105, %c0_i32_76] : memref<64x128xf32, #tpu.memory_space<any>> -> memref<1x128xf32, #tpu.memory_space<any>>
      %c7_i32_77 = arith.constant 7 : i32
      %c0_i32_78 = arith.constant 0 : i32
      %107 = tpu.memref_slice %arg4[%c0_i32_74, %c7_i32_77, %c0_i32_78] : memref<2x8x128xf32, #tpu.memory_space<vmem>> -> memref<1x1x128xf32, #tpu.memory_space<vmem>>
      %108 = tpu.memref_squeeze %107 : memref<1x1x128xf32, #tpu.memory_space<vmem>> -> memref<1x128xf32, #tpu.memory_space<vmem>>
      %109 = tpu.memref_slice %arg5[%c0_i32_75] : memref<2x!tpu.dma_semaphore, #tpu.memory_space<semaphore_mem>> -> memref<1x!tpu.dma_semaphore, #tpu.memory_space<semaphore_mem>>
      %110 = tpu.memref_squeeze %109 : memref<1x!tpu.dma_semaphore, #tpu.memory_space<semaphore_mem>> -> memref<!tpu.dma_semaphore, #tpu.memory_space<semaphore_mem>>
      tpu.enqueue_dma source(%106 : memref<1x128xf32, #tpu.memory_space<any>>) target(%108 : memref<1x128xf32, #tpu.memory_space<vmem>>) target_semaphore(%110 : memref<!tpu.dma_semaphore, #tpu.memory_space<semaphore_mem>>)
    } else {
    }
    %c1_i32_5 = arith.constant 1 : i32
    %13 = arith.addi %arg0, %c1_i32_5 : i32
    %c2_i32_6 = arith.constant 2 : i32
    %14 = arith.cmpi slt, %13, %c2_i32_6 : i32
    %15 = arith.extui %14 : i1 to i32
    %c0_i32_7 = arith.constant 0 : i32
    %16 = arith.cmpi ne, %15, %c0_i32_7 : i32
    scf.if %16 {
      %c1_i32_38 = arith.constant 1 : i32
      %63 = arith.addi %arg0, %c1_i32_38 : i32
      %c1_i32_39 = arith.constant 1 : i32
      %64 = arith.subi %c1_i32_39, %9 : i32
      %c8_i32 = arith.constant 8 : i32
      %65 = arith.muli %63, %c8_i32 : i32
      %c0_i32_40 = arith.constant 0 : i32
      %66 = arith.addi %65, %c0_i32_40 : i32
      %67 = arith.index_cast %66 : i32 to index
      %68 = memref.load %arg1[%67] : memref<16xi32, #tpu.memory_space<smem>>
      %c0_i32_41 = arith.constant 0 : i32
      %69 = tpu.memref_slice %arg2[%68, %c0_i32_41] : memref<64x128xf32, #tpu.memory_space<any>> -> memref<1x128xf32, #tpu.memory_space<any>>
      %c0_i32_42 = arith.constant 0 : i32
      %c0_i32_43 = arith.constant 0 : i32
      %70 = tpu.memref_slice %arg4[%64, %c0_i32_42, %c0_i32_43] : memref<2x8x128xf32, #tpu.memory_space<vmem>> -> memref<1x1x128xf32, #tpu.memory_space<vmem>>
      %71 = tpu.memref_squeeze %70 : memref<1x1x128xf32, #tpu.memory_space<vmem>> -> memref<1x128xf32, #tpu.memory_space<vmem>>
      %72 = tpu.memref_slice %arg5[%64] : memref<2x!tpu.dma_semaphore, #tpu.memory_space<semaphore_mem>> -> memref<1x!tpu.dma_semaphore, #tpu.memory_space<semaphore_mem>>
      %73 = tpu.memref_squeeze %72 : memref<1x!tpu.dma_semaphore, #tpu.memory_space<semaphore_mem>> -> memref<!tpu.dma_semaphore, #tpu.memory_space<semaphore_mem>>
      tpu.enqueue_dma source(%69 : memref<1x128xf32, #tpu.memory_space<any>>) target(%71 : memref<1x128xf32, #tpu.memory_space<vmem>>) target_semaphore(%73 : memref<!tpu.dma_semaphore, #tpu.memory_space<semaphore_mem>>)
      %c1_i32_44 = arith.constant 1 : i32
      %74 = arith.addi %65, %c1_i32_44 : i32
      %75 = arith.index_cast %74 : i32 to index
      %76 = memref.load %arg1[%75] : memref<16xi32, #tpu.memory_space<smem>>
      %c0_i32_45 = arith.constant 0 : i32
      %77 = tpu.memref_slice %arg2[%76, %c0_i32_45] : memref<64x128xf32, #tpu.memory_space<any>> -> memref<1x128xf32, #tpu.memory_space<any>>
      %c1_i32_46 = arith.constant 1 : i32
      %c0_i32_47 = arith.constant 0 : i32
      %78 = tpu.memref_slice %arg4[%64, %c1_i32_46, %c0_i32_47] : memref<2x8x128xf32, #tpu.memory_space<vmem>> -> memref<1x1x128xf32, #tpu.memory_space<vmem>>
      %79 = tpu.memref_squeeze %78 : memref<1x1x128xf32, #tpu.memory_space<vmem>> -> memref<1x128xf32, #tpu.memory_space<vmem>>
      %80 = tpu.memref_slice %arg5[%64] : memref<2x!tpu.dma_semaphore, #tpu.memory_space<semaphore_mem>> -> memref<1x!tpu.dma_semaphore, #tpu.memory_space<semaphore_mem>>
      %81 = tpu.memref_squeeze %80 : memref<1x!tpu.dma_semaphore, #tpu.memory_space<semaphore_mem>> -> memref<!tpu.dma_semaphore, #tpu.memory_space<semaphore_mem>>
      tpu.enqueue_dma source(%77 : memref<1x128xf32, #tpu.memory_space<any>>) target(%79 : memref<1x128xf32, #tpu.memory_space<vmem>>) target_semaphore(%81 : memref<!tpu.dma_semaphore, #tpu.memory_space<semaphore_mem>>)
      %c2_i32_48 = arith.constant 2 : i32
      %82 = arith.addi %65, %c2_i32_48 : i32
      %83 = arith.index_cast %82 : i32 to index
      %84 = memref.load %arg1[%83] : memref<16xi32, #tpu.memory_space<smem>>
      %c0_i32_49 = arith.constant 0 : i32
      %85 = tpu.memref_slice %arg2[%84, %c0_i32_49] : memref<64x128xf32, #tpu.memory_space<any>> -> memref<1x128xf32, #tpu.memory_space<any>>
      %c2_i32_50 = arith.constant 2 : i32
      %c0_i32_51 = arith.constant 0 : i32
      %86 = tpu.memref_slice %arg4[%64, %c2_i32_50, %c0_i32_51] : memref<2x8x128xf32, #tpu.memory_space<vmem>> -> memref<1x1x128xf32, #tpu.memory_space<vmem>>
      %87 = tpu.memref_squeeze %86 : memref<1x1x128xf32, #tpu.memory_space<vmem>> -> memref<1x128xf32, #tpu.memory_space<vmem>>
      %88 = tpu.memref_slice %arg5[%64] : memref<2x!tpu.dma_semaphore, #tpu.memory_space<semaphore_mem>> -> memref<1x!tpu.dma_semaphore, #tpu.memory_space<semaphore_mem>>
      %89 = tpu.memref_squeeze %88 : memref<1x!tpu.dma_semaphore, #tpu.memory_space<semaphore_mem>> -> memref<!tpu.dma_semaphore, #tpu.memory_space<semaphore_mem>>
      tpu.enqueue_dma source(%85 : memref<1x128xf32, #tpu.memory_space<any>>) target(%87 : memref<1x128xf32, #tpu.memory_space<vmem>>) target_semaphore(%89 : memref<!tpu.dma_semaphore, #tpu.memory_space<semaphore_mem>>)
      %c3_i32_52 = arith.constant 3 : i32
      %90 = arith.addi %65, %c3_i32_52 : i32
      %91 = arith.index_cast %90 : i32 to index
      %92 = memref.load %arg1[%91] : memref<16xi32, #tpu.memory_space<smem>>
      %c0_i32_53 = arith.constant 0 : i32
      %93 = tpu.memref_slice %arg2[%92, %c0_i32_53] : memref<64x128xf32, #tpu.memory_space<any>> -> memref<1x128xf32, #tpu.memory_space<any>>
      %c3_i32_54 = arith.constant 3 : i32
      %c0_i32_55 = arith.constant 0 : i32
      %94 = tpu.memref_slice %arg4[%64, %c3_i32_54, %c0_i32_55] : memref<2x8x128xf32, #tpu.memory_space<vmem>> -> memref<1x1x128xf32, #tpu.memory_space<vmem>>
      %95 = tpu.memref_squeeze %94 : memref<1x1x128xf32, #tpu.memory_space<vmem>> -> memref<1x128xf32, #tpu.memory_space<vmem>>
      %96 = tpu.memref_slice %arg5[%64] : memref<2x!tpu.dma_semaphore, #tpu.memory_space<semaphore_mem>> -> memref<1x!tpu.dma_semaphore, #tpu.memory_space<semaphore_mem>>
      %97 = tpu.memref_squeeze %96 : memref<1x!tpu.dma_semaphore, #tpu.memory_space<semaphore_mem>> -> memref<!tpu.dma_semaphore, #tpu.memory_space<semaphore_mem>>
      tpu.enqueue_dma source(%93 : memref<1x128xf32, #tpu.memory_space<any>>) target(%95 : memref<1x128xf32, #tpu.memory_space<vmem>>) target_semaphore(%97 : memref<!tpu.dma_semaphore, #tpu.memory_space<semaphore_mem>>)
      %c4_i32_56 = arith.constant 4 : i32
      %98 = arith.addi %65, %c4_i32_56 : i32
      %99 = arith.index_cast %98 : i32 to index
      %100 = memref.load %arg1[%99] : memref<16xi32, #tpu.memory_space<smem>>
      %c0_i32_57 = arith.constant 0 : i32
      %101 = tpu.memref_slice %arg2[%100, %c0_i32_57] : memref<64x128xf32, #tpu.memory_space<any>> -> memref<1x128xf32, #tpu.memory_space<any>>
      %c4_i32_58 = arith.constant 4 : i32
      %c0_i32_59 = arith.constant 0 : i32
      %102 = tpu.memref_slice %arg4[%64, %c4_i32_58, %c0_i32_59] : memref<2x8x128xf32, #tpu.memory_space<vmem>> -> memref<1x1x128xf32, #tpu.memory_space<vmem>>
      %103 = tpu.memref_squeeze %102 : memref<1x1x128xf32, #tpu.memory_space<vmem>> -> memref<1x128xf32, #tpu.memory_space<vmem>>
      %104 = tpu.memref_slice %arg5[%64] : memref<2x!tpu.dma_semaphore, #tpu.memory_space<semaphore_mem>> -> memref<1x!tpu.dma_semaphore, #tpu.memory_space<semaphore_mem>>
      %105 = tpu.memref_squeeze %104 : memref<1x!tpu.dma_semaphore, #tpu.memory_space<semaphore_mem>> -> memref<!tpu.dma_semaphore, #tpu.memory_space<semaphore_mem>>
      tpu.enqueue_dma source(%101 : memref<1x128xf32, #tpu.memory_space<any>>) target(%103 : memref<1x128xf32, #tpu.memory_space<vmem>>) target_semaphore(%105 : memref<!tpu.dma_semaphore, #tpu.memory_space<semaphore_mem>>)
      %c5_i32_60 = arith.constant 5 : i32
      %106 = arith.addi %65, %c5_i32_60 : i32
      %107 = arith.index_cast %106 : i32 to index
      %108 = memref.load %arg1[%107] : memref<16xi32, #tpu.memory_space<smem>>
      %c0_i32_61 = arith.constant 0 : i32
      %109 = tpu.memref_slice %arg2[%108, %c0_i32_61] : memref<64x128xf32, #tpu.memory_space<any>> -> memref<1x128xf32, #tpu.memory_space<any>>
      %c5_i32_62 = arith.constant 5 : i32
      %c0_i32_63 = arith.constant 0 : i32
      %110 = tpu.memref_slice %arg4[%64, %c5_i32_62, %c0_i32_63] : memref<2x8x128xf32, #tpu.memory_space<vmem>> -> memref<1x1x128xf32, #tpu.memory_space<vmem>>
      %111 = tpu.memref_squeeze %110 : memref<1x1x128xf32, #tpu.memory_space<vmem>> -> memref<1x128xf32, #tpu.memory_space<vmem>>
      %112 = tpu.memref_slice %arg5[%64] : memref<2x!tpu.dma_semaphore, #tpu.memory_space<semaphore_mem>> -> memref<1x!tpu.dma_semaphore, #tpu.memory_space<semaphore_mem>>
      %113 = tpu.memref_squeeze %112 : memref<1x!tpu.dma_semaphore, #tpu.memory_space<semaphore_mem>> -> memref<!tpu.dma_semaphore, #tpu.memory_space<semaphore_mem>>
      tpu.enqueue_dma source(%109 : memref<1x128xf32, #tpu.memory_space<any>>) target(%111 : memref<1x128xf32, #tpu.memory_space<vmem>>) target_semaphore(%113 : memref<!tpu.dma_semaphore, #tpu.memory_space<semaphore_mem>>)
      %c6_i32_64 = arith.constant 6 : i32
      %114 = arith.addi %65, %c6_i32_64 : i32
      %115 = arith.index_cast %114 : i32 to index
      %116 = memref.load %arg1[%115] : memref<16xi32, #tpu.memory_space<smem>>
      %c0_i32_65 = arith.constant 0 : i32
      %117 = tpu.memref_slice %arg2[%116, %c0_i32_65] : memref<64x128xf32, #tpu.memory_space<any>> -> memref<1x128xf32, #tpu.memory_space<any>>
      %c6_i32_66 = arith.constant 6 : i32
      %c0_i32_67 = arith.constant 0 : i32
      %118 = tpu.memref_slice %arg4[%64, %c6_i32_66, %c0_i32_67] : memref<2x8x128xf32, #tpu.memory_space<vmem>> -> memref<1x1x128xf32, #tpu.memory_space<vmem>>
      %119 = tpu.memref_squeeze %118 : memref<1x1x128xf32, #tpu.memory_space<vmem>> -> memref<1x128xf32, #tpu.memory_space<vmem>>
      %120 = tpu.memref_slice %arg5[%64] : memref<2x!tpu.dma_semaphore, #tpu.memory_space<semaphore_mem>> -> memref<1x!tpu.dma_semaphore, #tpu.memory_space<semaphore_mem>>
      %121 = tpu.memref_squeeze %120 : memref<1x!tpu.dma_semaphore, #tpu.memory_space<semaphore_mem>> -> memref<!tpu.dma_semaphore, #tpu.memory_space<semaphore_mem>>
      tpu.enqueue_dma source(%117 : memref<1x128xf32, #tpu.memory_space<any>>) target(%119 : memref<1x128xf32, #tpu.memory_space<vmem>>) target_semaphore(%121 : memref<!tpu.dma_semaphore, #tpu.memory_space<semaphore_mem>>)
      %c7_i32_68 = arith.constant 7 : i32
      %122 = arith.addi %65, %c7_i32_68 : i32
      %123 = arith.index_cast %122 : i32 to index
      %124 = memref.load %arg1[%123] : memref<16xi32, #tpu.memory_space<smem>>
      %c0_i32_69 = arith.constant 0 : i32
      %125 = tpu.memref_slice %arg2[%124, %c0_i32_69] : memref<64x128xf32, #tpu.memory_space<any>> -> memref<1x128xf32, #tpu.memory_space<any>>
      %c7_i32_70 = arith.constant 7 : i32
      %c0_i32_71 = arith.constant 0 : i32
      %126 = tpu.memref_slice %arg4[%64, %c7_i32_70, %c0_i32_71] : memref<2x8x128xf32, #tpu.memory_space<vmem>> -> memref<1x1x128xf32, #tpu.memory_space<vmem>>
      %127 = tpu.memref_squeeze %126 : memref<1x1x128xf32, #tpu.memory_space<vmem>> -> memref<1x128xf32, #tpu.memory_space<vmem>>
      %128 = tpu.memref_slice %arg5[%64] : memref<2x!tpu.dma_semaphore, #tpu.memory_space<semaphore_mem>> -> memref<1x!tpu.dma_semaphore, #tpu.memory_space<semaphore_mem>>
      %129 = tpu.memref_squeeze %128 : memref<1x!tpu.dma_semaphore, #tpu.memory_space<semaphore_mem>> -> memref<!tpu.dma_semaphore, #tpu.memory_space<semaphore_mem>>
      tpu.enqueue_dma source(%125 : memref<1x128xf32, #tpu.memory_space<any>>) target(%127 : memref<1x128xf32, #tpu.memory_space<vmem>>) target_semaphore(%129 : memref<!tpu.dma_semaphore, #tpu.memory_space<semaphore_mem>>)
    } else {
    }
    %c0_i32_8 = arith.constant 0 : i32
    %c0_i32_9 = arith.constant 0 : i32
    %17 = tpu.memref_slice %arg2[%c0_i32_8, %c0_i32_9] : memref<64x128xf32, #tpu.memory_space<any>> -> memref<1x128xf32, #tpu.memory_space<any>>
    %c0_i32_10 = arith.constant 0 : i32
    %c0_i32_11 = arith.constant 0 : i32
    %18 = tpu.memref_slice %arg4[%9, %c0_i32_10, %c0_i32_11] : memref<2x8x128xf32, #tpu.memory_space<vmem>> -> memref<1x1x128xf32, #tpu.memory_space<vmem>>
    %19 = tpu.memref_squeeze %18 : memref<1x1x128xf32, #tpu.memory_space<vmem>> -> memref<1x128xf32, #tpu.memory_space<vmem>>
    %20 = tpu.memref_slice %arg5[%9] : memref<2x!tpu.dma_semaphore, #tpu.memory_space<semaphore_mem>> -> memref<1x!tpu.dma_semaphore, #tpu.memory_space<semaphore_mem>>
    %21 = tpu.memref_squeeze %20 : memref<1x!tpu.dma_semaphore, #tpu.memory_space<semaphore_mem>> -> memref<!tpu.dma_semaphore, #tpu.memory_space<semaphore_mem>>
    tpu.wait_dma2 semaphore(%21 : memref<!tpu.dma_semaphore, #tpu.memory_space<semaphore_mem>>) src(%17 : memref<1x128xf32, #tpu.memory_space<any>>) dst(%19 : memref<1x128xf32, #tpu.memory_space<vmem>>)
    %c0_i32_12 = arith.constant 0 : i32
    %c0_i32_13 = arith.constant 0 : i32
    %22 = tpu.memref_slice %arg2[%c0_i32_12, %c0_i32_13] : memref<64x128xf32, #tpu.memory_space<any>> -> memref<1x128xf32, #tpu.memory_space<any>>
    %c1_i32_14 = arith.constant 1 : i32
    %c0_i32_15 = arith.constant 0 : i32
    %23 = tpu.memref_slice %arg4[%9, %c1_i32_14, %c0_i32_15] : memref<2x8x128xf32, #tpu.memory_space<vmem>> -> memref<1x1x128xf32, #tpu.memory_space<vmem>>
    %24 = tpu.memref_squeeze %23 : memref<1x1x128xf32, #tpu.memory_space<vmem>> -> memref<1x128xf32, #tpu.memory_space<vmem>>
    %25 = tpu.memref_slice %arg5[%9] : memref<2x!tpu.dma_semaphore, #tpu.memory_space<semaphore_mem>> -> memref<1x!tpu.dma_semaphore, #tpu.memory_space<semaphore_mem>>
    %26 = tpu.memref_squeeze %25 : memref<1x!tpu.dma_semaphore, #tpu.memory_space<semaphore_mem>> -> memref<!tpu.dma_semaphore, #tpu.memory_space<semaphore_mem>>
    tpu.wait_dma2 semaphore(%26 : memref<!tpu.dma_semaphore, #tpu.memory_space<semaphore_mem>>) src(%22 : memref<1x128xf32, #tpu.memory_space<any>>) dst(%24 : memref<1x128xf32, #tpu.memory_space<vmem>>)
    %c0_i32_16 = arith.constant 0 : i32
    %c0_i32_17 = arith.constant 0 : i32
    %27 = tpu.memref_slice %arg2[%c0_i32_16, %c0_i32_17] : memref<64x128xf32, #tpu.memory_space<any>> -> memref<1x128xf32, #tpu.memory_space<any>>
    %c2_i32_18 = arith.constant 2 : i32
    %c0_i32_19 = arith.constant 0 : i32
    %28 = tpu.memref_slice %arg4[%9, %c2_i32_18, %c0_i32_19] : memref<2x8x128xf32, #tpu.memory_space<vmem>> -> memref<1x1x128xf32, #tpu.memory_space<vmem>>
    %29 = tpu.memref_squeeze %28 : memref<1x1x128xf32, #tpu.memory_space<vmem>> -> memref<1x128xf32, #tpu.memory_space<vmem>>
    %30 = tpu.memref_slice %arg5[%9] : memref<2x!tpu.dma_semaphore, #tpu.memory_space<semaphore_mem>> -> memref<1x!tpu.dma_semaphore, #tpu.memory_space<semaphore_mem>>
    %31 = tpu.memref_squeeze %30 : memref<1x!tpu.dma_semaphore, #tpu.memory_space<semaphore_mem>> -> memref<!tpu.dma_semaphore, #tpu.memory_space<semaphore_mem>>
    tpu.wait_dma2 semaphore(%31 : memref<!tpu.dma_semaphore, #tpu.memory_space<semaphore_mem>>) src(%27 : memref<1x128xf32, #tpu.memory_space<any>>) dst(%29 : memref<1x128xf32, #tpu.memory_space<vmem>>)
    %c0_i32_20 = arith.constant 0 : i32
    %c0_i32_21 = arith.constant 0 : i32
    %32 = tpu.memref_slice %arg2[%c0_i32_20, %c0_i32_21] : memref<64x128xf32, #tpu.memory_space<any>> -> memref<1x128xf32, #tpu.memory_space<any>>
    %c3_i32 = arith.constant 3 : i32
    %c0_i32_22 = arith.constant 0 : i32
    %33 = tpu.memref_slice %arg4[%9, %c3_i32, %c0_i32_22] : memref<2x8x128xf32, #tpu.memory_space<vmem>> -> memref<1x1x128xf32, #tpu.memory_space<vmem>>
    %34 = tpu.memref_squeeze %33 : memref<1x1x128xf32, #tpu.memory_space<vmem>> -> memref<1x128xf32, #tpu.memory_space<vmem>>
    %35 = tpu.memref_slice %arg5[%9] : memref<2x!tpu.dma_semaphore, #tpu.memory_space<semaphore_mem>> -> memref<1x!tpu.dma_semaphore, #tpu.memory_space<semaphore_mem>>
    %36 = tpu.memref_squeeze %35 : memref<1x!tpu.dma_semaphore, #tpu.memory_space<semaphore_mem>> -> memref<!tpu.dma_semaphore, #tpu.memory_space<semaphore_mem>>
    tpu.wait_dma2 semaphore(%36 : memref<!tpu.dma_semaphore, #tpu.memory_space<semaphore_mem>>) src(%32 : memref<1x128xf32, #tpu.memory_space<any>>) dst(%34 : memref<1x128xf32, #tpu.memory_space<vmem>>)
    %c0_i32_23 = arith.constant 0 : i32
    %c0_i32_24 = arith.constant 0 : i32
    %37 = tpu.memref_slice %arg2[%c0_i32_23, %c0_i32_24] : memref<64x128xf32, #tpu.memory_space<any>> -> memref<1x128xf32, #tpu.memory_space<any>>
    %c4_i32 = arith.constant 4 : i32
    %c0_i32_25 = arith.constant 0 : i32
    %38 = tpu.memref_slice %arg4[%9, %c4_i32, %c0_i32_25] : memref<2x8x128xf32, #tpu.memory_space<vmem>> -> memref<1x1x128xf32, #tpu.memory_space<vmem>>
    %39 = tpu.memref_squeeze %38 : memref<1x1x128xf32, #tpu.memory_space<vmem>> -> memref<1x128xf32, #tpu.memory_space<vmem>>
    %40 = tpu.memref_slice %arg5[%9] : memref<2x!tpu.dma_semaphore, #tpu.memory_space<semaphore_mem>> -> memref<1x!tpu.dma_semaphore, #tpu.memory_space<semaphore_mem>>
    %41 = tpu.memref_squeeze %40 : memref<1x!tpu.dma_semaphore, #tpu.memory_space<semaphore_mem>> -> memref<!tpu.dma_semaphore, #tpu.memory_space<semaphore_mem>>
    tpu.wait_dma2 semaphore(%41 : memref<!tpu.dma_semaphore, #tpu.memory_space<semaphore_mem>>) src(%37 : memref<1x128xf32, #tpu.memory_space<any>>) dst(%39 : memref<1x128xf32, #tpu.memory_space<vmem>>)
    %c0_i32_26 = arith.constant 0 : i32
    %c0_i32_27 = arith.constant 0 : i32
    %42 = tpu.memref_slice %arg2[%c0_i32_26, %c0_i32_27] : memref<64x128xf32, #tpu.memory_space<any>> -> memref<1x128xf32, #tpu.memory_space<any>>
    %c5_i32 = arith.constant 5 : i32
    %c0_i32_28 = arith.constant 0 : i32
    %43 = tpu.memref_slice %arg4[%9, %c5_i32, %c0_i32_28] : memref<2x8x128xf32, #tpu.memory_space<vmem>> -> memref<1x1x128xf32, #tpu.memory_space<vmem>>
    %44 = tpu.memref_squeeze %43 : memref<1x1x128xf32, #tpu.memory_space<vmem>> -> memref<1x128xf32, #tpu.memory_space<vmem>>
    %45 = tpu.memref_slice %arg5[%9] : memref<2x!tpu.dma_semaphore, #tpu.memory_space<semaphore_mem>> -> memref<1x!tpu.dma_semaphore, #tpu.memory_space<semaphore_mem>>
    %46 = tpu.memref_squeeze %45 : memref<1x!tpu.dma_semaphore, #tpu.memory_space<semaphore_mem>> -> memref<!tpu.dma_semaphore, #tpu.memory_space<semaphore_mem>>
    tpu.wait_dma2 semaphore(%46 : memref<!tpu.dma_semaphore, #tpu.memory_space<semaphore_mem>>) src(%42 : memref<1x128xf32, #tpu.memory_space<any>>) dst(%44 : memref<1x128xf32, #tpu.memory_space<vmem>>)
    %c0_i32_29 = arith.constant 0 : i32
    %c0_i32_30 = arith.constant 0 : i32
    %47 = tpu.memref_slice %arg2[%c0_i32_29, %c0_i32_30] : memref<64x128xf32, #tpu.memory_space<any>> -> memref<1x128xf32, #tpu.memory_space<any>>
    %c6_i32 = arith.constant 6 : i32
    %c0_i32_31 = arith.constant 0 : i32
    %48 = tpu.memref_slice %arg4[%9, %c6_i32, %c0_i32_31] : memref<2x8x128xf32, #tpu.memory_space<vmem>> -> memref<1x1x128xf32, #tpu.memory_space<vmem>>
    %49 = tpu.memref_squeeze %48 : memref<1x1x128xf32, #tpu.memory_space<vmem>> -> memref<1x128xf32, #tpu.memory_space<vmem>>
    %50 = tpu.memref_slice %arg5[%9] : memref<2x!tpu.dma_semaphore, #tpu.memory_space<semaphore_mem>> -> memref<1x!tpu.dma_semaphore, #tpu.memory_space<semaphore_mem>>
    %51 = tpu.memref_squeeze %50 : memref<1x!tpu.dma_semaphore, #tpu.memory_space<semaphore_mem>> -> memref<!tpu.dma_semaphore, #tpu.memory_space<semaphore_mem>>
    tpu.wait_dma2 semaphore(%51 : memref<!tpu.dma_semaphore, #tpu.memory_space<semaphore_mem>>) src(%47 : memref<1x128xf32, #tpu.memory_space<any>>) dst(%49 : memref<1x128xf32, #tpu.memory_space<vmem>>)
    %c0_i32_32 = arith.constant 0 : i32
    %c0_i32_33 = arith.constant 0 : i32
    %52 = tpu.memref_slice %arg2[%c0_i32_32, %c0_i32_33] : memref<64x128xf32, #tpu.memory_space<any>> -> memref<1x128xf32, #tpu.memory_space<any>>
    %c7_i32 = arith.constant 7 : i32
    %c0_i32_34 = arith.constant 0 : i32
    %53 = tpu.memref_slice %arg4[%9, %c7_i32, %c0_i32_34] : memref<2x8x128xf32, #tpu.memory_space<vmem>> -> memref<1x1x128xf32, #tpu.memory_space<vmem>>
    %54 = tpu.memref_squeeze %53 : memref<1x1x128xf32, #tpu.memory_space<vmem>> -> memref<1x128xf32, #tpu.memory_space<vmem>>
    %55 = tpu.memref_slice %arg5[%9] : memref<2x!tpu.dma_semaphore, #tpu.memory_space<semaphore_mem>> -> memref<1x!tpu.dma_semaphore, #tpu.memory_space<semaphore_mem>>
    %56 = tpu.memref_squeeze %55 : memref<1x!tpu.dma_semaphore, #tpu.memory_space<semaphore_mem>> -> memref<!tpu.dma_semaphore, #tpu.memory_space<semaphore_mem>>
    tpu.wait_dma2 semaphore(%56 : memref<!tpu.dma_semaphore, #tpu.memory_space<semaphore_mem>>) src(%52 : memref<1x128xf32, #tpu.memory_space<any>>) dst(%54 : memref<1x128xf32, #tpu.memory_space<vmem>>)
    %57 = arith.index_cast %9 : i32 to index
    %c0 = arith.constant 0 : index
    %c0_35 = arith.constant 0 : index
    %58 = vector.load %arg4[%57, %c0, %c0_35] : memref<2x8x128xf32, #tpu.memory_space<vmem>>, vector<1x8x128xf32>
    %59 = vector.shape_cast %58 : vector<1x8x128xf32> to vector<8x128xf32>
    %cst = arith.constant 11.3137083 : f32
    %60 = vector.broadcast %cst : f32 to vector<8x128xf32>
    %61 = arith.mulf %59, %60 : vector<8x128xf32>
    %c0_36 = arith.constant 0 : index
    %c0_37 = arith.constant 0 : index
    %62 = vector.load %arg3[%c0_36, %c0_37] : memref<8x128xf32, #tpu.memory_space<vmem>>, vector<8x128xf32>
    tpu.vector_store %arg3[%c0_36, %c0_37], %61 {strides = array<i32>} : memref<8x128xf32, #tpu.memory_space<vmem>>, vector<8x128xf32>,
    return
  }
  func.func @transform_1(%arg0: i32, %arg1: memref<16xi32, #tpu.memory_space<smem>>) -> (i32, i32) {
    %c0_i32 = arith.constant 0 : i32
    %c0_i32_0 = arith.constant 0 : i32
    return %arg0, %c0_i32 : i32, i32
  }
}

</mosaic_0001>

<llo_original>
// kernel: tpu_custom_call.1
$region0: #{tpu_custom_call.1}
  #allocation0 [shape = 'u32[]', space=smem, size = 0x4, offset = 0x4, fixed_abs, tag = 'smem constant byte address 0x4 - core index']
  #allocation1 [shape = 'u32[144,128]{1,0:T(1,128)}', space=vmem, size = 0x12000, scoped, tag = 'internal scratch']
  #allocation2 [shape = 'f32[2,8,128]{2,1,0:T(8,128)}', space=vmem, size = 0x2000, scoped, tag = 'scratch operand']
  #allocation3 [shape = 's32[2]{0}', space=sflag, size = 0x8, scoped, tag = 'scratch operand']
  #allocation4 [shape = 's32[1]{0}', space=sflag, size = 0x4, scoped, tag = 'scoped memory for tpu_custom_call.1']
  #allocation5 [shape = 'u8[512]{0}', space=smem, size = 0x200, scoped, tag = 'prefetched SMEM operand 0']
  #allocation8 [shape = 's32[]', space=sflag, size = 0x4, offset = 0, fixed_abs, tag = 'sflag constant byte address 0x0 - dummy sync flag']
  #allocation9 [shape = 's32[]', space=sflag, size = 0x4, offset = 0, fixed_abs, tag = 'sflag constant byte address 0x0 - dummy sync flag']
  #allocation10 [shape = 'u32[]', space=smem, size = 0x4, offset = 0x44, fixed_abs, tag = 'smem constant byte address 0x44 - assertion arg 0']
  #allocation11 [shape = 'u32[]', space=smem, size = 0x4, offset = 0x48, fixed_abs, tag = 'smem constant byte address 0x48 - assertion arg 1']
  #allocation12 [shape = 's32[]', space=sflag, size = 0x4, offset = 0, fixed_abs, tag = 'sflag constant byte address 0x0 - dummy sync flag']
  #allocation13 [shape = 's32[]', space=sflag, size = 0x4, offset = 0, fixed_abs, tag = 'sflag constant byte address 0x0 - dummy sync flag']
  #allocation14 [shape = 's32[]', space=sflag, size = 0x4, offset = 0, fixed_abs, tag = 'sflag constant byte address 0x0 - dummy sync flag']
  #allocation15 [shape = 's32[]', space=sflag, size = 0x4, offset = 0, fixed_abs, tag = 'sflag constant byte address 0x0 - dummy sync flag']
  #allocation16 [shape = 's32[]', space=sflag, size = 0x4, offset = 0, fixed_abs, tag = 'sflag constant byte address 0x0 - dummy sync flag']
  #allocation17 [shape = 's32[]', space=sflag, size = 0x4, offset = 0, fixed_abs, tag = 'sflag constant byte address 0x0 - dummy sync flag']
  #allocation18 [shape = 's32[]', space=sflag, size = 0x4, offset = 0, fixed_abs, tag = 'sflag constant byte address 0x0 - dummy sync flag']
  #allocation19 [shape = 's32[]', space=sflag, size = 0x4, offset = 0, fixed_abs, tag = 'sflag constant byte address 0x0 - dummy sync flag']
  #allocation20 [shape = 's32[]', space=sflag, size = 0x4, offset = 0, fixed_abs, tag = 'sflag constant byte address 0x0 - dummy sync flag']
  #allocation21 [shape = 's32[]', space=sflag, size = 0x4, offset = 0, fixed_abs, tag = 'sflag constant byte address 0x0 - dummy sync flag']
  #allocation22 [shape = 's32[]', space=sflag, size = 0x4, offset = 0, fixed_abs, tag = 'sflag constant byte address 0x0 - dummy sync flag']
  #allocation23 [shape = 's32[]', space=sflag, size = 0x4, offset = 0, fixed_abs, tag = 'sflag constant byte address 0x0 - dummy sync flag']
  #allocation24 [shape = 's32[]', space=sflag, size = 0x4, offset = 0, fixed_abs, tag = 'sflag constant byte address 0x0 - dummy sync flag']
  #allocation25 [shape = 's32[]', space=sflag, size = 0x4, offset = 0, fixed_abs, tag = 'sflag constant byte address 0x0 - dummy sync flag']
  #allocation26 [shape = 's32[]', space=sflag, size = 0x4, offset = 0, fixed_abs, tag = 'sflag constant byte address 0x0 - dummy sync flag']
  #allocation27 [shape = 's32[]', space=sflag, size = 0x4, offset = 0, fixed_abs, tag = 'sflag constant byte address 0x0 - dummy sync flag']
  #allocation28 [shape = 's32[]', space=sflag, size = 0x4, offset = 0, fixed_abs, tag = 'sflag constant byte address 0x0 - dummy sync flag']
  #allocation29 [shape = 's32[]', space=sflag, size = 0x4, offset = 0, fixed_abs, tag = 'sflag constant byte address 0x0 - dummy sync flag']
  #allocation30 [shape = 's32[]', space=sflag, size = 0x4, offset = 0, fixed_abs, tag = 'sflag constant byte address 0x0 - dummy sync flag']
  #allocation31 [shape = 's32[]', space=sflag, size = 0x4, offset = 0, fixed_abs, tag = 'sflag constant byte address 0x0 - dummy sync flag']
  #allocation32 [shape = 's32[]', space=sflag, size = 0x4, offset = 0, fixed_abs, tag = 'sflag constant byte address 0x0 - dummy sync flag']
  #allocation33 [shape = 's32[]', space=sflag, size = 0x4, offset = 0, fixed_abs, tag = 'sflag constant byte address 0x0 - dummy sync flag']
  #allocation34 [shape = 's32[]', space=sflag, size = 0x4, offset = 0, fixed_abs, tag = 'sflag constant byte address 0x0 - dummy sync flag']
  #allocation35 [shape = 's32[]', space=sflag, size = 0x4, offset = 0, fixed_abs, tag = 'sflag constant byte address 0x0 - dummy sync flag']
  #allocation36 [shape = 's32[]', space=sflag, size = 0x4, offset = 0, fixed_abs, tag = 'sflag constant byte address 0x0 - dummy sync flag']
  #allocation37 [shape = 's32[]', space=sflag, size = 0x4, offset = 0, fixed_abs, tag = 'sflag constant byte address 0x0 - dummy sync flag']
  #allocation38 [shape = 's32[]', space=sflag, size = 0x4, offset = 0, fixed_abs, tag = 'sflag constant byte address 0x0 - dummy sync flag']
  #allocation39 [shape = 's32[]', space=sflag, size = 0x4, offset = 0, fixed_abs, tag = 'sflag constant byte address 0x0 - dummy sync flag']
  #allocation40 [shape = 's32[]', space=sflag, size = 0x4, offset = 0, fixed_abs, tag = 'sflag constant byte address 0x0 - dummy sync flag']
  #allocation41 [shape = 's32[]', space=sflag, size = 0x4, offset = 0, fixed_abs, tag = 'sflag constant byte address 0x0 - dummy sync flag']
  %s0 = inlined_call_operand.hbm [shape: s32[16], index: 0, kind: input, shape index: {}]
  %s1 = inlined_call_operand.hbm [shape: f32[64,128], index: 1, kind: input, shape index: {}]
  %s2 = inlined_call_operand.hbm [shape: f32[16,128], index: 2, kind: output, shape index: {}]
  %s3 = sld [smem:[#allocation0]]
  $region97: #{tpu_custom_call.1} parent=0
    _
  %s5 = ssub.s32 1, %s3
  %s6 = scalar_select 0, %s5, %s3
  %8 = dma.hbm_to_smem %s0, 16, [#allocation5], [#allocation4]
  %9 = dma.done [#allocation4], 16
  %10 = sfence
  $region1: #{tpu_custom_call.1} parent=0
    #allocation6 [shape = 'u8[8192]{0}', space=vmem, size = 0x2000, scoped, tag = 'output window, operand 0']
    #allocation7 [shape = 's32[2]{0}', space=sflag, size = 0x8, scoped, tag = 'scoped memory for tpu_custom_call.1']
    %11 = vsyncpa [#allocation7], 0
    %s12 = scalar_lea.sflag [#allocation7], 1
    %13 = vsyncpa %s12, 0
    loop: start=0, step=1, limit=3
    $region2: #{tpu_custom_call.1} parent=1 // loop_pre_header
      _
    $region3: #{tpu_custom_call.1} parent=1 // loop_header
      %s15 = sphi 0, %s19
      %p16 = scmp.ge.s32.totalorder %s15, 3
      %s24 = sphi 0, %s26
      %s27 = sphi 0, %s24
      %s37 = sphi 0, %s27
    $region4: #{tpu_custom_call.1} parent=1 // loop_header_branch
      %18 = sbr.rel (%p16) target = $region8
    $region5: #{tpu_custom_call.1} parent=1 // loop_body
      %s20 = ssub.s32 %s15, 1
      %s21 = sadd.s32 %s15, 1
      %s22 = ssub.s32 %s15, %s21
      %p23 = scmp.eq.s32.totalorder %s22, 0
      %s25 = sadd.s32 %s24, 1
      %s26 = scalar_select %p23, %s24, %s25
      %p28 = pneg %p23
      %p29 = scmp.eq.s32.totalorder %s15, 1
      %p30 = por %p28, %p29
      %p31 = scmp.ne.s32.totalorder %s24, %s27
      %p32 = scmp.eq.s32.totalorder %s15, 0
      %p33 = por %p31, %p32
      %p34 = scmp.ne.s32.totalorder %s24, %s27
      %p35 = scmp.eq.s32.totalorder %s20, 1
      %p36 = por %p34, %p35
      %p38 = scmp.ne.s32.totalorder %s27, %s37
      %p39 = scmp.eq.s32.totalorder %s20, 0
      %p40 = por %p38, %p39
      %p41 = scmp.lt.s32.totalorder %s15, 2
      // Predicated region
      $region9: #{tpu_custom_call.1} parent=5 // pred_check
        %p42 = pneg %p41
      $region10: #{tpu_custom_call.1} parent=5 // pred_check_branch
        %44 = sbr.rel (%p42) target = $region12
      $region11: #{tpu_custom_call.1} parent=5 // pred_region
        %p45 = pneg %p33
        %p46 = pneg %p30
        %s47 = sand.u32 %s24, 1
        %s48 = scalar_lea.sflag [#allocation7], %s47
        %s49 = sand.u32 %s24, 1
        %s50 = smul.addr %s49, 8
        %s51 = scalar_lea.vmem [#allocation6], %s50
        %p52 = scmp.lt.s32.totalorder %s15, 0
        %s53 = ssub.s32 0, %s15
        %s54 = scalar_select %p52, %s53, %s15
        %s55 = sand.u32 %s54, 1
        %s56 = ssub.s32 0, %s55
        %s57 = scalar_select %p52, %s56, %s55
        %p58 = scmp.ne.s32.totalorder %s57, 0
        %p59 = scmp.lt.s32.totalorder %s57, 0
        %p60 = pnand %p59, %p58
        %p61 = pneg %p60
        %s62 = sadd.s32 %s57, 2
        %s63 = scalar_select %p61, %s62, %s57
        %p64 = scmp.eq.s32.totalorder %s15, 0
        // Predicated region
        $region13: #{tpu_custom_call.1} parent=11 // pred_check
          %p65 = pneg %p64
        $region14: #{tpu_custom_call.1} parent=11 // pred_check_branch
          %67 = sbr.rel (%p65) target = $region16
        $region15: #{tpu_custom_call.1} parent=11 // pred_region
          %s68 = sld [smem:[#allocation5]]
          %s69 = smul.addr %s68, 16
          %s70 = scalar_lea.hbm %s1, %s69
          // Predicated region
          $region17: #{tpu_custom_call.1} parent=15 // pred_check
            _
          $region18: #{tpu_custom_call.1} parent=15 // pred_check_branch
            %72 = sbr.rel target = $region20
          $region19: #{tpu_custom_call.1} parent=15 // pred_region
            %73 = sst [smem:[#allocation10]] [#allocation9]
            %74 = sst [smem:[#allocation11]] [#allocation8]
          $region20: #{tpu_custom_call.1} parent=15 // pred_fallthru
            _
          %76 = shalt.err (0)
          %s78 = sshll.u32 [#allocation2], 4
          %s79 = int_to_ptr.vmem [resolvable:$true] %s78
          %81 = dma.hbm_to_vmem [thread:$0]  %s70, 16, %s79, [#allocation3]
          %s82 = sld [smem:[#allocation5 + $0x1]]
          %s83 = smul.addr %s82, 16
          %s84 = scalar_lea.hbm %s1, %s83
          %s85 = scalar_lea.vmem [#allocation2], 1
          // Predicated region
          $region21: #{tpu_custom_call.1} parent=15 // pred_check
            _
          $region22: #{tpu_custom_call.1} parent=15 // pred_check_branch
            %87 = sbr.rel target = $region24
          $region23: #{tpu_custom_call.1} parent=15 // pred_region
            %88 = sst [smem:[#allocation10]] [#allocation13]
            %89 = sst [smem:[#allocation11]] [#allocation12]
          $region24: #{tpu_custom_call.1} parent=15 // pred_fallthru
            _
          %91 = shalt.err (0)
          %s93 = sshll.u32 %s85, 4
          %s94 = int_to_ptr.vmem [resolvable:$true] %s93
          %96 = dma.hbm_to_vmem [thread:$0]  %s84, 16, %s94, [#allocation3]
          %s97 = sld [smem:[#allocation5 + $0x2]]
          %s98 = smul.addr %s97, 16
          %s99 = scalar_lea.hbm %s1, %s98
          %s100 = scalar_lea.vmem [#allocation2], 2
          // Predicated region
          $region25: #{tpu_custom_call.1} parent=15 // pred_check
            _
          $region26: #{tpu_custom_call.1} parent=15 // pred_check_branch
            %102 = sbr.rel target = $region28
          $region27: #{tpu_custom_call.1} parent=15 // pred_region
            %103 = sst [smem:[#allocation10]] [#allocation15]
            %104 = sst [smem:[#allocation11]] [#allocation14]
          $region28: #{tpu_custom_call.1} parent=15 // pred_fallthru
            _
          %106 = shalt.err (0)
          %s108 = sshll.u32 %s100, 4
          %s109 = int_to_ptr.vmem [resolvable:$true] %s108
          %111 = dma.hbm_to_vmem [thread:$0]  %s99, 16, %s109, [#allocation3]
          %s112 = sld [smem:[#allocation5 + $0x3]]
          %s113 = smul.addr %s112, 16
          %s114 = scalar_lea.hbm %s1, %s113
          %s115 = scalar_lea.vmem [#allocation2], 3
          // Predicated region
          $region29: #{tpu_custom_call.1} parent=15 // pred_check
            _
          $region30: #{tpu_custom_call.1} parent=15 // pred_check_branch
            %117 = sbr.rel target = $region32
          $region31: #{tpu_custom_call.1} parent=15 // pred_region
            %118 = sst [smem:[#allocation10]] [#allocation17]
            %119 = sst [smem:[#allocation11]] [#allocation16]
          $region32: #{tpu_custom_call.1} parent=15 // pred_fallthru
            _
          %121 = shalt.err (0)
          %s123 = sshll.u32 %s115, 4
          %s124 = int_to_ptr.vmem [resolvable:$true] %s123
          %126 = dma.hbm_to_vmem [thread:$0]  %s114, 16, %s124, [#allocation3]
          %s127 = sld [smem:[#allocation5 + $0x4]]
          %s128 = smul.addr %s127, 16
          %s129 = scalar_lea.hbm %s1, %s128
          %s130 = scalar_lea.vmem [#allocation2], 4
          // Predicated region
          $region33: #{tpu_custom_call.1} parent=15 // pred_check
            _
          $region34: #{tpu_custom_call.1} parent=15 // pred_check_branch
            %132 = sbr.rel target = $region36
          $region35: #{tpu_custom_call.1} parent=15 // pred_region
            %133 = sst [smem:[#allocation10]] [#allocation19]
            %134 = sst [smem:[#allocation11]] [#allocation18]
          $region36: #{tpu_custom_call.1} parent=15 // pred_fallthru
            _
          %136 = shalt.err (0)
          %s138 = sshll.u32 %s130, 4
          %s139 = int_to_ptr.vmem [resolvable:$true] %s138
          %141 = dma.hbm_to_vmem [thread:$0]  %s129, 16, %s139, [#allocation3]
          %s142 = sld [smem:[#allocation5 + $0x5]]
          %s143 = smul.addr %s142, 16
          %s144 = scalar_lea.hbm %s1, %s143
          %s145 = scalar_lea.vmem [#allocation2], 5
          // Predicated region
          $region37: #{tpu_custom_call.1} parent=15 // pred_check
            _
          $region38: #{tpu_custom_call.1} parent=15 // pred_check_branch
            %147 = sbr.rel target = $region40
          $region39: #{tpu_custom_call.1} parent=15 // pred_region
            %148 = sst [smem:[#allocation10]] [#allocation21]
            %149 = sst [smem:[#allocation11]] [#allocation20]
          $region40: #{tpu_custom_call.1} parent=15 // pred_fallthru
            _
          %151 = shalt.err (0)
          %s153 = sshll.u32 %s145, 4
          %s154 = int_to_ptr.vmem [resolvable:$true] %s153
          %156 = dma.hbm_to_vmem [thread:$0]  %s144, 16, %s154, [#allocation3]
          %s157 = sld [smem:[#allocation5 + $0x6]]
          %s158 = smul.addr %s157, 16
          %s159 = scalar_lea.hbm %s1, %s158
          %s160 = scalar_lea.vmem [#allocation2], 6
          // Predicated region
          $region41: #{tpu_custom_call.1} parent=15 // pred_check
            _
          $region42: #{tpu_custom_call.1} parent=15 // pred_check_branch
            %162 = sbr.rel target = $region44
          $region43: #{tpu_custom_call.1} parent=15 // pred_region
            %163 = sst [smem:[#allocation10]] [#allocation23]
            %164 = sst [smem:[#allocation11]] [#allocation22]
          $region44: #{tpu_custom_call.1} parent=15 // pred_fallthru
            _
          %166 = shalt.err (0)
          %s168 = sshll.u32 %s160, 4
          %s169 = int_to_ptr.vmem [resolvable:$true] %s168
          %171 = dma.hbm_to_vmem [thread:$0]  %s159, 16, %s169, [#allocation3]
          %s172 = sld [smem:[#allocation5 + $0x7]]
          %s173 = smul.addr %s172, 16
          %s174 = scalar_lea.hbm %s1, %s173
          %s175 = scalar_lea.vmem [#allocation2], 7
          // Predicated region
          $region45: #{tpu_custom_call.1} parent=15 // pred_check
            _
          $region46: #{tpu_custom_call.1} parent=15 // pred_check_branch
            %177 = sbr.rel target = $region48
          $region47: #{tpu_custom_call.1} parent=15 // pred_region
            %178 = sst [smem:[#allocation10]] [#allocation25]
            %179 = sst [smem:[#allocation11]] [#allocation24]
          $region48: #{tpu_custom_call.1} parent=15 // pred_fallthru
            _
          %181 = shalt.err (0)
          %s183 = sshll.u32 %s175, 4
          %s184 = int_to_ptr.vmem [resolvable:$true] %s183
          %186 = dma.hbm_to_vmem [thread:$0]  %s174, 16, %s184, [#allocation3]
        $region16: #{tpu_custom_call.1} parent=11 // pred_fallthru
          _
        %s187 = sadd.s32 %s15, 1
        %p188 = scmp.lt.s32.totalorder %s187, 2
        // Predicated region
        $region49: #{tpu_custom_call.1} parent=11 // pred_check
          %p189 = pneg %p188
        $region50: #{tpu_custom_call.1} parent=11 // pred_check_branch
          %191 = sbr.rel (%p189) target = $region52
        $region51: #{tpu_custom_call.1} parent=11 // pred_region
          %s192 = ssub.s32 1, %s63
          %s193 = smul.u32 %s187, 8
          %s194 = sld [smem:[#allocation5 + %s193]]
          %s195 = smul.addr %s194, 16
          %s196 = scalar_lea.hbm %s1, %s195
          %s197 = smul.u32 %s192, 8
          %s198 = scalar_lea.vmem [#allocation2], %s197
          %s199 = scalar_lea.sflag [#allocation3], %s192
          // Predicated region
          $region53: #{tpu_custom_call.1} parent=51 // pred_check
            _
          $region54: #{tpu_custom_call.1} parent=51 // pred_check_branch
            %201 = sbr.rel target = $region56
          $region55: #{tpu_custom_call.1} parent=51 // pred_region
            %202 = sst [smem:[#allocation10]] [#allocation27]
            %203 = sst [smem:[#allocation11]] [#allocation26]
          $region56: #{tpu_custom_call.1} parent=51 // pred_fallthru
            _
          %205 = shalt.err (0)
          %s207 = sshll.u32 %s198, 4
          %s208 = int_to_ptr.vmem [resolvable:$true] %s207
          %210 = dma.hbm_to_vmem [thread:$0]  %s196, 16, %s208, %s199
          %s211 = sadd.s32 %s193, 1
          %s212 = sld [smem:[#allocation5 + %s211]]
          %s213 = smul.addr %s212, 16
          %s214 = scalar_lea.hbm %s1, %s213
          %s215 = sadd.s32 1, %s197
          %s216 = scalar_lea.vmem [#allocation2], %s215
          // Predicated region
          $region57: #{tpu_custom_call.1} parent=51 // pred_check
            _
          $region58: #{tpu_custom_call.1} parent=51 // pred_check_branch
            %218 = sbr.rel target = $region60
          $region59: #{tpu_custom_call.1} parent=51 // pred_region
            %219 = sst [smem:[#allocation10]] [#allocation29]
            %220 = sst [smem:[#allocation11]] [#allocation28]
          $region60: #{tpu_custom_call.1} parent=51 // pred_fallthru
            _
          %222 = shalt.err (0)
          %s224 = sshll.u32 %s216, 4
          %s225 = int_to_ptr.vmem [resolvable:$true] %s224
          %227 = dma.hbm_to_vmem [thread:$0]  %s214, 16, %s225, %s199
          %s228 = sadd.s32 %s193, 2
          %s229 = sld [smem:[#allocation5 + %s228]]
          %s230 = smul.addr %s229, 16
          %s231 = scalar_lea.hbm %s1, %s230
          %s232 = sadd.s32 2, %s197
          %s233 = scalar_lea.vmem [#allocation2], %s232
          // Predicated region
          $region61: #{tpu_custom_call.1} parent=51 // pred_check
            _
          $region62: #{tpu_custom_call.1} parent=51 // pred_check_branch
            %235 = sbr.rel target = $region64
          $region63: #{tpu_custom_call.1} parent=51 // pred_region
            %236 = sst [smem:[#allocation10]] [#allocation31]
            %237 = sst [smem:[#allocation11]] [#allocation30]
          $region64: #{tpu_custom_call.1} parent=51 // pred_fallthru
            _
          %239 = shalt.err (0)
          %s241 = sshll.u32 %s233, 4
          %s242 = int_to_ptr.vmem [resolvable:$true] %s241
          %244 = dma.hbm_to_vmem [thread:$0]  %s231, 16, %s242, %s199
          %s245 = sadd.s32 %s193, 3
          %s246 = sld [smem:[#allocation5 + %s245]]
          %s247 = smul.addr %s246, 16
          %s248 = scalar_lea.hbm %s1, %s247
          %s249 = sadd.s32 3, %s197
          %s250 = scalar_lea.vmem [#allocation2], %s249
          // Predicated region
          $region65: #{tpu_custom_call.1} parent=51 // pred_check
            _
          $region66: #{tpu_custom_call.1} parent=51 // pred_check_branch
            %252 = sbr.rel target = $region68
          $region67: #{tpu_custom_call.1} parent=51 // pred_region
            %253 = sst [smem:[#allocation10]] [#allocation33]
            %254 = sst [smem:[#allocation11]] [#allocation32]
          $region68: #{tpu_custom_call.1} parent=51 // pred_fallthru
            _
          %256 = shalt.err (0)
          %s258 = sshll.u32 %s250, 4
          %s259 = int_to_ptr.vmem [resolvable:$true] %s258
          %261 = dma.hbm_to_vmem [thread:$0]  %s248, 16, %s259, %s199
          %s262 = sadd.s32 %s193, 4
          %s263 = sld [smem:[#allocation5 + %s262]]
          %s264 = smul.addr %s263, 16
          %s265 = scalar_lea.hbm %s1, %s264
          %s266 = sadd.s32 4, %s197
          %s267 = scalar_lea.vmem [#allocation2], %s266
          // Predicated region
          $region69: #{tpu_custom_call.1} parent=51 // pred_check
            _
          $region70: #{tpu_custom_call.1} parent=51 // pred_check_branch
            %269 = sbr.rel target = $region72
          $region71: #{tpu_custom_call.1} parent=51 // pred_region
            %270 = sst [smem:[#allocation10]] [#allocation35]
            %271 = sst [smem:[#allocation11]] [#allocation34]
          $region72: #{tpu_custom_call.1} parent=51 // pred_fallthru
            _
          %273 = shalt.err (0)
          %s275 = sshll.u32 %s267, 4
          %s276 = int_to_ptr.vmem [resolvable:$true] %s275
          %278 = dma.hbm_to_vmem [thread:$0]  %s265, 16, %s276, %s199
          %s279 = sadd.s32 %s193, 5
          %s280 = sld [smem:[#allocation5 + %s279]]
          %s281 = smul.addr %s280, 16
          %s282 = scalar_lea.hbm %s1, %s281
          %s283 = sadd.s32 5, %s197
          %s284 = scalar_lea.vmem [#allocation2], %s283
          // Predicated region
          $region73: #{tpu_custom_call.1} parent=51 // pred_check
            _
          $region74: #{tpu_custom_call.1} parent=51 // pred_check_branch
            %286 = sbr.rel target = $region76
          $region75: #{tpu_custom_call.1} parent=51 // pred_region
            %287 = sst [smem:[#allocation10]] [#allocation37]
            %288 = sst [smem:[#allocation11]] [#allocation36]
          $region76: #{tpu_custom_call.1} parent=51 // pred_fallthru
            _
          %290 = shalt.err (0)
          %s292 = sshll.u32 %s284, 4
          %s293 = int_to_ptr.vmem [resolvable:$true] %s292
          %295 = dma.hbm_to_vmem [thread:$0]  %s282, 16, %s293, %s199
          %s296 = sadd.s32 %s193, 6
          %s297 = sld [smem:[#allocation5 + %s296]]
          %s298 = smul.addr %s297, 16
          %s299 = scalar_lea.hbm %s1, %s298
          %s300 = sadd.s32 6, %s197
          %s301 = scalar_lea.vmem [#allocation2], %s300
          // Predicated region
          $region77: #{tpu_custom_call.1} parent=51 // pred_check
            _
          $region78: #{tpu_custom_call.1} parent=51 // pred_check_branch
            %303 = sbr.rel target = $region80
          $region79: #{tpu_custom_call.1} parent=51 // pred_region
            %304 = sst [smem:[#allocation10]] [#allocation39]
            %305 = sst [smem:[#allocation11]] [#allocation38]
          $region80: #{tpu_custom_call.1} parent=51 // pred_fallthru
            _
          %307 = shalt.err (0)
          %s309 = sshll.u32 %s301, 4
          %s310 = int_to_ptr.vmem [resolvable:$true] %s309
          %312 = dma.hbm_to_vmem [thread:$0]  %s299, 16, %s310, %s199
          %s313 = sadd.s32 %s193, 7
          %s314 = sld [smem:[#allocation5 + %s313]]
          %s315 = smul.addr %s314, 16
          %s316 = scalar_lea.hbm %s1, %s315
          %s317 = sadd.s32 7, %s197
          %s318 = scalar_lea.vmem [#allocation2], %s317
          // Predicated region
          $region81: #{tpu_custom_call.1} parent=51 // pred_check
            _
          $region82: #{tpu_custom_call.1} parent=51 // pred_check_branch
            %320 = sbr.rel target = $region84
          $region83: #{tpu_custom_call.1} parent=51 // pred_region
            %321 = sst [smem:[#allocation10]] [#allocation41]
            %322 = sst [smem:[#allocation11]] [#allocation40]
          $region84: #{tpu_custom_call.1} parent=51 // pred_fallthru
            _
          %324 = shalt.err (0)
          %s326 = sshll.u32 %s318, 4
          %s327 = int_to_ptr.vmem [resolvable:$true] %s326
          %329 = dma.hbm_to_vmem [thread:$0]  %s316, 16, %s327, %s199
        $region52: #{tpu_custom_call.1} parent=11 // pred_fallthru
          _
        %s330 = scalar_lea.sflag [#allocation3], %s63
        %s331 = smul.u32 1, 1
        %s332 = sshll.u32 %s331, 4
        %333 = dma.done %s330, %s332
        %s334 = sshll.u32 %s331, 4
        %335 = dma.done %s330, %s334
        %s336 = sshll.u32 %s331, 4
        %337 = dma.done %s330, %s336
        %s338 = sshll.u32 %s331, 4
        %339 = dma.done %s330, %s338
        %s340 = sshll.u32 %s331, 4
        %341 = dma.done %s330, %s340
        %s342 = sshll.u32 %s331, 4
        %343 = dma.done %s330, %s342
        %s344 = sshll.u32 %s331, 4
        %345 = dma.done %s330, %s344
        %s346 = sshll.u32 %s331, 4
        %347 = dma.done %s330, %s346
        %s348 = smul.u32 %s63, 8
        %s349 = scalar_lea.vmem [#allocation2], %s348
        %v350 = vld [vmem:[%s349] sm:$0xff]
        %v351 = vmul.f32 %v350, 11.313708
        %352 = vst [vmem:[%s51] sm:$0xff] %v351
        %s353 = sand.u32 %s24, 1
        %s354 = scalar_lea.sflag [#allocation7], %s353
        %s355 = sand.u32 %s24, 1
        %s356 = smul.addr %s355, 8
        %s357 = scalar_lea.vmem [#allocation6], %s356
        // Predicated region
        $region85: #{tpu_custom_call.1} parent=11 // pred_check
          %p358 = pneg %p30
        $region86: #{tpu_custom_call.1} parent=11 // pred_check_branch
          %360 = sbr.rel (%p358) target = $region88
        $region87: #{tpu_custom_call.1} parent=11 // pred_region
          %s362 = ssub.s32 128, 128
          %363 = vsyncadd %s354, %s362
          %s364 = smul.addr %s15, 128
          %s365 = scalar_lea.hbm %s2, %s364
          %s367 = sshll.u32 %s357, 4
          %s368 = int_to_ptr.vmem [resolvable:$true] %s367
          %370 = dma.vmem_to_hbm [thread:$0]  %s368, 128, %s365, %s354
        $region88: #{tpu_custom_call.1} parent=11 // pred_fallthru
          _
      $region12: #{tpu_custom_call.1} parent=5 // pred_fallthru
        _
      %p371 = scmp.le.s32.totalorder 1, %s15
      // Predicated region
      $region89: #{tpu_custom_call.1} parent=5 // pred_check
        %p372 = pneg %p371
      $region90: #{tpu_custom_call.1} parent=5 // pred_check_branch
        %374 = sbr.rel (%p372) target = $region92
      $region91: #{tpu_custom_call.1} parent=5 // pred_region
        %s375 = ssub.s32 %s15, 1
        // Predicated region
        $region93: #{tpu_custom_call.1} parent=91 // pred_check
          %p376 = pneg %p36
        $region94: #{tpu_custom_call.1} parent=91 // pred_check_branch
          %378 = sbr.rel (%p376) target = $region96
        $region95: #{tpu_custom_call.1} parent=91 // pred_region
          %s379 = sand.u32 %s27, 1
          %s380 = scalar_lea.sflag [#allocation7], %s379
          %s381 = sand.u32 %s27, 1
          %s382 = smul.addr %s381, 8
          %s383 = scalar_lea.vmem [#allocation6], %s382
          %384 = dma.done %s380, 128
        $region96: #{tpu_custom_call.1} parent=91 // pred_fallthru
          _
      $region92: #{tpu_custom_call.1} parent=5 // pred_fallthru
        _
    $region6: #{tpu_custom_call.1} parent=1 // loop_footer
      %s19 = sadd.s32 1, %s15
    $region7: #{tpu_custom_call.1} parent=1 // loop_footer_branch
      %14 = sbr.rel target = $region3
    $region8: #{tpu_custom_call.1} parent=1 // loop_exit
      _
    %385 = vsyncpa [#allocation7], 1
    %s386 = scalar_lea.sflag [#allocation7], 1
    %387 = vsyncpa %s386, 1
  %388 = vsyncmov [#allocation3]
  %s389 = vpop.sfrf %388
  %p390 = scmp.eq.s32.totalorder %s389, 0
  %p391 = pneg %p390
  %393 = shalt.err (%p391)
  %s394 = scalar_lea.sflag [#allocation3], 1
  %395 = vsyncmov %s394
  %s396 = vpop.sfrf %395
  %p397 = scmp.eq.s32.totalorder %s396, 0
  %p398 = pneg %p397
  %400 = shalt.err (%p398)

</llo_original>
